<compile_context>
chip_gen: v7x
topology: tpu7x:2x2x1
jax: 0.10.0
libtpu: 0.0.40
codegen_flags: <defaults>
</compile_context>

<pallas_src>
import jax
import jax.numpy as jnp
from jax.experimental import pallas as pl
from jax.experimental.pallas import tpu as pltpu


def gru_seq_kernel(x_ref, wih_ref, whh_ref, bgi_ref, bhn_ref, out_ref):
    """One batch tile of the GRU; whole sequence resident in VMEM.

    x_ref:   (T*Bt, D)  time-major rows within the tile (row t*Bt + b)
    wih_ref: (D, 3H)    W_ih^T
    whh_ref: (H, 3H)    W_hh^T
    bgi_ref: (1, 3H)    b_ih with b_hh[r], b_hh[z] pre-folded in
    bhn_ref: (1, H)     b_hh[n] (must stay inside the r*(...) term)
    out_ref: (Bt, T*H)  lane-dense output slab; columns t*H:(t+1)*H = h_t
    """
    TB, _ = x_ref.shape
    H = whh_ref.shape[0]
    Bt = out_ref.shape[0]
    T = TB // Bt

    # ---- Phase 1 (time-parallel): input projection for every timestep at
    # once on the MXU.  r/z bias fully folded in -> no bias add for r/z in the
    # serial loop.
    gi = jnp.dot(x_ref[...], wih_ref[...],
                 preferred_element_type=jnp.float32) + bgi_ref[...]

    whh = whh_ref[...]                                  # (H, 3H), resident
    bhn = jnp.broadcast_to(bhn_ref[...], (Bt, H))       # hoisted broadcast

    # ---- Phase 2 (serial recurrence), fully unrolled over the small static T.
    # TODO(synk): for non-toy T, chunk with lax.fori_loop(..., unroll=8) and
    # store each h_t with a per-step slice instead of collecting T live values.
    h = jnp.zeros((Bt, H), jnp.float32)                 # init_hidden(): zeros
    outs = []
    for t in range(T):
        # Time-major gi: a static *contiguous sublane block* per step — no
        # per-step cross-sublane gather on the serial dependence chain.
        gi_t = gi[t * Bt:(t + 1) * Bt, :]               # (Bt, 3H)
        gh = jnp.dot(h, whh, preferred_element_type=jnp.float32)   # (Bt, 3H)
        # r and z with ONE fused sigmoid over a (Bt, 2H) slab.
        rz = jax.nn.sigmoid(gi_t[:, :2 * H] + gh[:, :2 * H])
        r = rz[:, :H]
        z = rz[:, H:]
        # n-gate: b_hh[n] cannot be folded — it sits inside the r*(...) term.
        n = jnp.tanh(gi_t[:, 2 * H:] + r * (gh[:, 2 * H:] + bhn))
        h = (1.0 - z) * n + z * h
        outs.append(h)

    # Single lane-dense (Bt, T*H) bulk store -> unmasked full-lane vst.
    out_ref[...] = jnp.concatenate(outs, axis=-1).astype(out_ref.dtype)


def prepare_gru_params(w_ih, w_hh, b_ih, b_hh):
    """One-time parameter prep (call once at setup, outside the jitted forward).

    Pre-transposes the weights and folds the r/z slices of b_hh into b_ih
    (they add linearly for those gates); the n slice of b_hh stays separate.
    """
    H = w_hh.shape[1]
    wih_t = jnp.transpose(w_ih)                         # (D, 3H)
    whh_t = jnp.transpose(w_hh)                         # (H, 3H)
    b_gi = (b_ih + jnp.concatenate(
        [b_hh[:2 * H], jnp.zeros((H,), b_hh.dtype)])).reshape(1, 3 * H)
    b_hn = b_hh[2 * H:].reshape(1, H)
    # TODO(synk): for v6e/v7x production shapes, also cast wih_t/whh_t (and x)
    # to bfloat16 here; keep preferred_element_type=f32 and gate math in f32.
    return wih_t, whh_t, b_gi, b_hn


@jax.jit
def video_embedding_forward(x, wih_t, whh_t, b_gi, b_hn):
    """VideoEmbedding.forward: single-layer unidirectional GRU, zero h0.

    x: (B, T, D) batch_first.  Returns (B, T, H).
    """
    B, T, D = x.shape
    H = whh_t.shape[0]

    # Batch is the only parallel / MXU-filling axis of the recurrence.
    # Cap the tile at 128 rows (v5e MXU height; multiple of 8 f32 sublanes).
    B_tile = B if B <= 128 else 128
    assert B % B_tile == 0, "pad batch to a multiple of 128 for production"
    n_btiles = B // B_tile

    # Lay x out so each batch tile is a contiguous 2-D block whose rows are
    # time-major (row t*B_tile + b): the kernel then needs zero per-step
    # relayouts.  One XLA-side transform in HBM; for n_btiles == 1 this is
    # just transpose(1, 0, 2) + reshape.
    x_rows = (x.reshape(n_btiles, B_tile, T, D)
               .transpose(0, 2, 1, 3)
               .reshape(n_btiles * T * B_tile, D))

    out_flat = pl.pallas_call(
        gru_seq_kernel,
        out_shape=jax.ShapeDtypeStruct((B, T * H), x.dtype),
        grid=(n_btiles,),
        in_specs=[
            pl.BlockSpec((T * B_tile, D), lambda b: (b, 0)),   # x, batch-tiled
            pl.BlockSpec((D, 3 * H), lambda b: (0, 0)),        # W_ih^T
            pl.BlockSpec((H, 3 * H), lambda b: (0, 0)),        # W_hh^T
            pl.BlockSpec((1, 3 * H), lambda b: (0, 0)),        # folded b_ih
            pl.BlockSpec((1, H), lambda b: (0, 0)),            # b_hh[n]
        ],
        # Lane-dense (B_tile, T*H) output tile: unmasked full-lane stores.
        out_specs=pl.BlockSpec((B_tile, T * H), lambda b: (b, 0)),
        compiler_params=pltpu.CompilerParams(
            # Independent batch tiles: double-buffered DMAs and, on v7x,
            # sharding across both TensorCores.
            dimension_semantics=("parallel",)),
        # TODO(synk): on v7x (64 MiB VMEM) for production (B_tile, T, 3H),
        # set vmem_limit_bytes and/or keep gi in bf16 / per-time-chunk.
    )(x_rows, wih_t, whh_t, b_gi, b_hn)

    # Free contiguous reshape back to batch_first (B, T, H).
    return out_flat.reshape(B, T, H)


def gru_reference(x, w_ih, w_hh, b_ih, b_hh):
    """Pure-JAX reference (matches torch.nn.GRU, single layer, unidirectional)."""
    B, T, D = x.shape
    H = w_hh.shape[1]

    def step(h, x_t):
        gi = x_t @ w_ih.T + b_ih
        gh = h @ w_hh.T + b_hh
        r = jax.nn.sigmoid(gi[:, :H] + gh[:, :H])
        z = jax.nn.sigmoid(gi[:, H:2 * H] + gh[:, H:2 * H])
        n = jnp.tanh(gi[:, 2 * H:] + r * gh[:, 2 * H:])
        h_new = (1.0 - z) * n + z * h
        return h_new, h_new

    h0 = jnp.zeros((B, H), x.dtype)
    _, ys = jax.lax.scan(step, h0, jnp.transpose(x, (1, 0, 2)))
    return jnp.transpose(ys, (1, 0, 2))


if __name__ == "__main__":
    # VideoEmbedding(in_dim=16, num_hidden=32, num_layer=1, bidirect=False, dropout=0.0)
    B, T, D, H = 2, 8, 16, 32

    key = jax.random.PRNGKey(0)
    kx, k1, k2, k3, k4 = jax.random.split(key, 5)

    # Deterministic params, PyTorch-style uniform(-1/sqrt(H), 1/sqrt(H)).
    bound = 1.0 / jnp.sqrt(jnp.float32(H))
    w_ih = jax.random.uniform(k1, (3 * H, D), jnp.float32, -bound, bound)
    w_hh = jax.random.uniform(k2, (3 * H, H), jnp.float32, -bound, bound)
    b_ih = jax.random.uniform(k3, (3 * H,), jnp.float32, -bound, bound)
    b_hh = jax.random.uniform(k4, (3 * H,), jnp.float32, -bound, bound)

    x = jax.random.normal(kx, (B, T, D), jnp.float32)

    # One-time parameter prep (transposes + bias folding) outside the jit.
    wih_t, whh_t, b_gi, b_hn = prepare_gru_params(w_ih, w_hh, b_ih, b_hh)

    out = video_embedding_forward(x, wih_t, whh_t, b_gi, b_hn)
    jax.block_until_ready(out)

    ref = gru_reference(x, w_ih, w_hh, b_ih, b_hh)
    assert out.shape == (B, T, H)
    assert jnp.allclose(out, ref, atol=1e-5, rtol=1e-5), "mismatch vs reference"

    print("KERNEL_OK")
</pallas_src>

<mosaic_0001>
module attributes {stable_mosaic.version = 11 : i64} {
  func.func @gru_seq_kernel(%arg0: i32, %arg1: memref<16x16xf32, #tpu.memory_space<vmem>>, %arg2: memref<16x96xf32, #tpu.memory_space<vmem>>, %arg3: memref<32x96xf32, #tpu.memory_space<vmem>>, %arg4: memref<1x96xf32, #tpu.memory_space<vmem>>, %arg5: memref<1x32xf32, #tpu.memory_space<vmem>>, %arg6: memref<2x256xf32, #tpu.memory_space<vmem>>) attributes {dimension_semantics = [#tpu.dimension_semantics<parallel>], iteration_bounds = array<i64: 1>, scalar_prefetch = 0 : i64, scratch_operands = 0 : i64, tpu.core_type = #tpu.core_type<tc>, window_params = [{transform_indices = @transform_0, window_bounds = array<i64: 16, 16>}, {pipeline_mode = #tpu.pipeline_mode<synchronous>, transform_indices = @transform_1, window_bounds = array<i64: 16, 96>}, {pipeline_mode = #tpu.pipeline_mode<synchronous>, transform_indices = @transform_2, window_bounds = array<i64: 32, 96>}, {pipeline_mode = #tpu.pipeline_mode<synchronous>, transform_indices = @transform_3, window_bounds = array<i64: 1, 96>}, {pipeline_mode = #tpu.pipeline_mode<synchronous>, transform_indices = @transform_4, window_bounds = array<i64: 1, 32>}, {transform_indices = @transform_5, window_bounds = array<i64: 2, 256>}]} {
    %c0 = arith.constant 0 : index
    %c0_0 = arith.constant 0 : index
    %0 = vector.load %arg1[%c0, %c0_0] : memref<16x16xf32, #tpu.memory_space<vmem>>, vector<16x16xf32>
    %c0_1 = arith.constant 0 : index
    %c0_2 = arith.constant 0 : index
    %1 = vector.load %arg2[%c0_1, %c0_2] : memref<16x96xf32, #tpu.memory_space<vmem>>, vector<16x96xf32>
    %cst = arith.constant dense<0.000000e+00> : vector<16x96xf32>
    %2 = tpu.matmul %0, %1, %cst {dimension_numbers = #tpu.dot_dimension_numbers<[1], [0], [0], [1], [0, 0, 1, 1], [], []>} : vector<16x16xf32>, vector<16x96xf32>, vector<16x96xf32> -> vector<16x96xf32>
    %c0_3 = arith.constant 0 : index
    %c0_4 = arith.constant 0 : index
    %3 = vector.load %arg4[%c0_3, %c0_4] : memref<1x96xf32, #tpu.memory_space<vmem>>, vector<1x96xf32>
    %4 = vector.broadcast %3 : vector<1x96xf32> to vector<16x96xf32>
    %5 = arith.addf %2, %4 : vector<16x96xf32>
    %c0_5 = arith.constant 0 : index
    %c0_6 = arith.constant 0 : index
    %6 = vector.load %arg3[%c0_5, %c0_6] : memref<32x96xf32, #tpu.memory_space<vmem>>, vector<32x96xf32>
    %c0_7 = arith.constant 0 : index
    %c0_8 = arith.constant 0 : index
    %7 = vector.load %arg5[%c0_7, %c0_8] : memref<1x32xf32, #tpu.memory_space<vmem>>, vector<1x32xf32>
    %8 = vector.shape_cast %7 : vector<1x32xf32> to vector<1x32xf32>
    %9 = vector.broadcast %8 : vector<1x32xf32> to vector<2x32xf32>
    %cst_9 = arith.constant 0.000000e+00 : f32
    %10 = vector.broadcast %cst_9 : f32 to vector<2x32xf32>
    %11 = vector.extract_strided_slice %5 {offsets = [0, 0], sizes = [2, 96], strides = [1, 1]} : vector<16x96xf32> to vector<2x96xf32>
    %cst_10 = arith.constant dense<0.000000e+00> : vector<2x96xf32>
    %12 = tpu.matmul %10, %6, %cst_10 {dimension_numbers = #tpu.dot_dimension_numbers<[1], [0], [0], [1], [0, 0, 1, 1], [], []>} : vector<2x32xf32>, vector<32x96xf32>, vector<2x96xf32> -> vector<2x96xf32>
    %13 = vector.extract_strided_slice %11 {offsets = [0, 0], sizes = [2, 64], strides = [1, 1]} : vector<2x96xf32> to vector<2x64xf32>
    %14 = vector.extract_strided_slice %12 {offsets = [0, 0], sizes = [2, 64], strides = [1, 1]} : vector<2x96xf32> to vector<2x64xf32>
    %15 = arith.addf %13, %14 : vector<2x64xf32>
    %16 = arith.negf %15 : vector<2x64xf32>
    %17 = math.exp %16 : vector<2x64xf32>
    %cst_11 = arith.constant 1.000000e+00 : f32
    %18 = vector.broadcast %cst_11 : f32 to vector<2x64xf32>
    %19 = arith.addf %18, %17 : vector<2x64xf32>
    %20 = arith.divf %18, %19 : vector<2x64xf32>
    %21 = vector.extract_strided_slice %20 {offsets = [0, 0], sizes = [2, 32], strides = [1, 1]} : vector<2x64xf32> to vector<2x32xf32>
    %22 = vector.extract_strided_slice %20 {offsets = [0, 32], sizes = [2, 32], strides = [1, 1]} : vector<2x64xf32> to vector<2x32xf32>
    %23 = vector.extract_strided_slice %11 {offsets = [0, 64], sizes = [2, 32], strides = [1, 1]} : vector<2x96xf32> to vector<2x32xf32>
    %24 = vector.extract_strided_slice %12 {offsets = [0, 64], sizes = [2, 32], strides = [1, 1]} : vector<2x96xf32> to vector<2x32xf32>
    %25 = arith.addf %24, %9 : vector<2x32xf32>
    %26 = arith.mulf %21, %25 : vector<2x32xf32>
    %27 = arith.addf %23, %26 : vector<2x32xf32>
    %28 = math.tanh %27 : vector<2x32xf32>
    %cst_12 = arith.constant 1.000000e+00 : f32
    %29 = vector.broadcast %cst_12 : f32 to vector<2x32xf32>
    %30 = arith.subf %29, %22 : vector<2x32xf32>
    %31 = arith.mulf %30, %28 : vector<2x32xf32>
    %32 = arith.mulf %22, %10 : vector<2x32xf32>
    %33 = arith.addf %31, %32 : vector<2x32xf32>
    %34 = vector.extract_strided_slice %5 {offsets = [2, 0], sizes = [2, 96], strides = [1, 1]} : vector<16x96xf32> to vector<2x96xf32>
    %cst_13 = arith.constant dense<0.000000e+00> : vector<2x96xf32>
    %35 = tpu.matmul %33, %6, %cst_13 {dimension_numbers = #tpu.dot_dimension_numbers<[1], [0], [0], [1], [0, 0, 1, 1], [], []>} : vector<2x32xf32>, vector<32x96xf32>, vector<2x96xf32> -> vector<2x96xf32>
    %36 = vector.extract_strided_slice %34 {offsets = [0, 0], sizes = [2, 64], strides = [1, 1]} : vector<2x96xf32> to vector<2x64xf32>
    %37 = vector.extract_strided_slice %35 {offsets = [0, 0], sizes = [2, 64], strides = [1, 1]} : vector<2x96xf32> to vector<2x64xf32>
    %38 = arith.addf %36, %37 : vector<2x64xf32>
    %39 = arith.negf %38 : vector<2x64xf32>
    %40 = math.exp %39 : vector<2x64xf32>
    %cst_14 = arith.constant 1.000000e+00 : f32
    %41 = vector.broadcast %cst_14 : f32 to vector<2x64xf32>
    %42 = arith.addf %41, %40 : vector<2x64xf32>
    %43 = arith.divf %41, %42 : vector<2x64xf32>
    %44 = vector.extract_strided_slice %43 {offsets = [0, 0], sizes = [2, 32], strides = [1, 1]} : vector<2x64xf32> to vector<2x32xf32>
    %45 = vector.extract_strided_slice %43 {offsets = [0, 32], sizes = [2, 32], strides = [1, 1]} : vector<2x64xf32> to vector<2x32xf32>
    %46 = vector.extract_strided_slice %34 {offsets = [0, 64], sizes = [2, 32], strides = [1, 1]} : vector<2x96xf32> to vector<2x32xf32>
    %47 = vector.extract_strided_slice %35 {offsets = [0, 64], sizes = [2, 32], strides = [1, 1]} : vector<2x96xf32> to vector<2x32xf32>
    %48 = arith.addf %47, %9 : vector<2x32xf32>
    %49 = arith.mulf %44, %48 : vector<2x32xf32>
    %50 = arith.addf %46, %49 : vector<2x32xf32>
    %51 = math.tanh %50 : vector<2x32xf32>
    %cst_15 = arith.constant 1.000000e+00 : f32
    %52 = vector.broadcast %cst_15 : f32 to vector<2x32xf32>
    %53 = arith.subf %52, %45 : vector<2x32xf32>
    %54 = arith.mulf %53, %51 : vector<2x32xf32>
    %55 = arith.mulf %45, %33 : vector<2x32xf32>
    %56 = arith.addf %54, %55 : vector<2x32xf32>
    %57 = vector.extract_strided_slice %5 {offsets = [4, 0], sizes = [2, 96], strides = [1, 1]} : vector<16x96xf32> to vector<2x96xf32>
    %cst_16 = arith.constant dense<0.000000e+00> : vector<2x96xf32>
    %58 = tpu.matmul %56, %6, %cst_16 {dimension_numbers = #tpu.dot_dimension_numbers<[1], [0], [0], [1], [0, 0, 1, 1], [], []>} : vector<2x32xf32>, vector<32x96xf32>, vector<2x96xf32> -> vector<2x96xf32>
    %59 = vector.extract_strided_slice %57 {offsets = [0, 0], sizes = [2, 64], strides = [1, 1]} : vector<2x96xf32> to vector<2x64xf32>
    %60 = vector.extract_strided_slice %58 {offsets = [0, 0], sizes = [2, 64], strides = [1, 1]} : vector<2x96xf32> to vector<2x64xf32>
    %61 = arith.addf %59, %60 : vector<2x64xf32>
    %62 = arith.negf %61 : vector<2x64xf32>
    %63 = math.exp %62 : vector<2x64xf32>
    %cst_17 = arith.constant 1.000000e+00 : f32
    %64 = vector.broadcast %cst_17 : f32 to vector<2x64xf32>
    %65 = arith.addf %64, %63 : vector<2x64xf32>
    %66 = arith.divf %64, %65 : vector<2x64xf32>
    %67 = vector.extract_strided_slice %66 {offsets = [0, 0], sizes = [2, 32], strides = [1, 1]} : vector<2x64xf32> to vector<2x32xf32>
    %68 = vector.extract_strided_slice %66 {offsets = [0, 32], sizes = [2, 32], strides = [1, 1]} : vector<2x64xf32> to vector<2x32xf32>
    %69 = vector.extract_strided_slice %57 {offsets = [0, 64], sizes = [2, 32], strides = [1, 1]} : vector<2x96xf32> to vector<2x32xf32>
    %70 = vector.extract_strided_slice %58 {offsets = [0, 64], sizes = [2, 32], strides = [1, 1]} : vector<2x96xf32> to vector<2x32xf32>
    %71 = arith.addf %70, %9 : vector<2x32xf32>
    %72 = arith.mulf %67, %71 : vector<2x32xf32>
    %73 = arith.addf %69, %72 : vector<2x32xf32>
    %74 = math.tanh %73 : vector<2x32xf32>
    %cst_18 = arith.constant 1.000000e+00 : f32
    %75 = vector.broadcast %cst_18 : f32 to vector<2x32xf32>
    %76 = arith.subf %75, %68 : vector<2x32xf32>
    %77 = arith.mulf %76, %74 : vector<2x32xf32>
    %78 = arith.mulf %68, %56 : vector<2x32xf32>
    %79 = arith.addf %77, %78 : vector<2x32xf32>
    %80 = vector.extract_strided_slice %5 {offsets = [6, 0], sizes = [2, 96], strides = [1, 1]} : vector<16x96xf32> to vector<2x96xf32>
    %cst_19 = arith.constant dense<0.000000e+00> : vector<2x96xf32>
    %81 = tpu.matmul %79, %6, %cst_19 {dimension_numbers = #tpu.dot_dimension_numbers<[1], [0], [0], [1], [0, 0, 1, 1], [], []>} : vector<2x32xf32>, vector<32x96xf32>, vector<2x96xf32> -> vector<2x96xf32>
    %82 = vector.extract_strided_slice %80 {offsets = [0, 0], sizes = [2, 64], strides = [1, 1]} : vector<2x96xf32> to vector<2x64xf32>
    %83 = vector.extract_strided_slice %81 {offsets = [0, 0], sizes = [2, 64], strides = [1, 1]} : vector<2x96xf32> to vector<2x64xf32>
    %84 = arith.addf %82, %83 : vector<2x64xf32>
    %85 = arith.negf %84 : vector<2x64xf32>
    %86 = math.exp %85 : vector<2x64xf32>
    %cst_20 = arith.constant 1.000000e+00 : f32
    %87 = vector.broadcast %cst_20 : f32 to vector<2x64xf32>
    %88 = arith.addf %87, %86 : vector<2x64xf32>
    %89 = arith.divf %87, %88 : vector<2x64xf32>
    %90 = vector.extract_strided_slice %89 {offsets = [0, 0], sizes = [2, 32], strides = [1, 1]} : vector<2x64xf32> to vector<2x32xf32>
    %91 = vector.extract_strided_slice %89 {offsets = [0, 32], sizes = [2, 32], strides = [1, 1]} : vector<2x64xf32> to vector<2x32xf32>
    %92 = vector.extract_strided_slice %80 {offsets = [0, 64], sizes = [2, 32], strides = [1, 1]} : vector<2x96xf32> to vector<2x32xf32>
    %93 = vector.extract_strided_slice %81 {offsets = [0, 64], sizes = [2, 32], strides = [1, 1]} : vector<2x96xf32> to vector<2x32xf32>
    %94 = arith.addf %93, %9 : vector<2x32xf32>
    %95 = arith.mulf %90, %94 : vector<2x32xf32>
    %96 = arith.addf %92, %95 : vector<2x32xf32>
    %97 = math.tanh %96 : vector<2x32xf32>
    %cst_21 = arith.constant 1.000000e+00 : f32
    %98 = vector.broadcast %cst_21 : f32 to vector<2x32xf32>
    %99 = arith.subf %98, %91 : vector<2x32xf32>
    %100 = arith.mulf %99, %97 : vector<2x32xf32>
    %101 = arith.mulf %91, %79 : vector<2x32xf32>
    %102 = arith.addf %100, %101 : vector<2x32xf32>
    %103 = vector.extract_strided_slice %5 {offsets = [8, 0], sizes = [2, 96], strides = [1, 1]} : vector<16x96xf32> to vector<2x96xf32>
    %cst_22 = arith.constant dense<0.000000e+00> : vector<2x96xf32>
    %104 = tpu.matmul %102, %6, %cst_22 {dimension_numbers = #tpu.dot_dimension_numbers<[1], [0], [0], [1], [0, 0, 1, 1], [], []>} : vector<2x32xf32>, vector<32x96xf32>, vector<2x96xf32> -> vector<2x96xf32>
    %105 = vector.extract_strided_slice %103 {offsets = [0, 0], sizes = [2, 64], strides = [1, 1]} : vector<2x96xf32> to vector<2x64xf32>
    %106 = vector.extract_strided_slice %104 {offsets = [0, 0], sizes = [2, 64], strides = [1, 1]} : vector<2x96xf32> to vector<2x64xf32>
    %107 = arith.addf %105, %106 : vector<2x64xf32>
    %108 = arith.negf %107 : vector<2x64xf32>
    %109 = math.exp %108 : vector<2x64xf32>
    %cst_23 = arith.constant 1.000000e+00 : f32
    %110 = vector.broadcast %cst_23 : f32 to vector<2x64xf32>
    %111 = arith.addf %110, %109 : vector<2x64xf32>
    %112 = arith.divf %110, %111 : vector<2x64xf32>
    %113 = vector.extract_strided_slice %112 {offsets = [0, 0], sizes = [2, 32], strides = [1, 1]} : vector<2x64xf32> to vector<2x32xf32>
    %114 = vector.extract_strided_slice %112 {offsets = [0, 32], sizes = [2, 32], strides = [1, 1]} : vector<2x64xf32> to vector<2x32xf32>
    %115 = vector.extract_strided_slice %103 {offsets = [0, 64], sizes = [2, 32], strides = [1, 1]} : vector<2x96xf32> to vector<2x32xf32>
    %116 = vector.extract_strided_slice %104 {offsets = [0, 64], sizes = [2, 32], strides = [1, 1]} : vector<2x96xf32> to vector<2x32xf32>
    %117 = arith.addf %116, %9 : vector<2x32xf32>
    %118 = arith.mulf %113, %117 : vector<2x32xf32>
    %119 = arith.addf %115, %118 : vector<2x32xf32>
    %120 = math.tanh %119 : vector<2x32xf32>
    %cst_24 = arith.constant 1.000000e+00 : f32
    %121 = vector.broadcast %cst_24 : f32 to vector<2x32xf32>
    %122 = arith.subf %121, %114 : vector<2x32xf32>
    %123 = arith.mulf %122, %120 : vector<2x32xf32>
    %124 = arith.mulf %114, %102 : vector<2x32xf32>
    %125 = arith.addf %123, %124 : vector<2x32xf32>
    %126 = vector.extract_strided_slice %5 {offsets = [10, 0], sizes = [2, 96], strides = [1, 1]} : vector<16x96xf32> to vector<2x96xf32>
    %cst_25 = arith.constant dense<0.000000e+00> : vector<2x96xf32>
    %127 = tpu.matmul %125, %6, %cst_25 {dimension_numbers = #tpu.dot_dimension_numbers<[1], [0], [0], [1], [0, 0, 1, 1], [], []>} : vector<2x32xf32>, vector<32x96xf32>, vector<2x96xf32> -> vector<2x96xf32>
    %128 = vector.extract_strided_slice %126 {offsets = [0, 0], sizes = [2, 64], strides = [1, 1]} : vector<2x96xf32> to vector<2x64xf32>
    %129 = vector.extract_strided_slice %127 {offsets = [0, 0], sizes = [2, 64], strides = [1, 1]} : vector<2x96xf32> to vector<2x64xf32>
    %130 = arith.addf %128, %129 : vector<2x64xf32>
    %131 = arith.negf %130 : vector<2x64xf32>
    %132 = math.exp %131 : vector<2x64xf32>
    %cst_26 = arith.constant 1.000000e+00 : f32
    %133 = vector.broadcast %cst_26 : f32 to vector<2x64xf32>
    %134 = arith.addf %133, %132 : vector<2x64xf32>
    %135 = arith.divf %133, %134 : vector<2x64xf32>
    %136 = vector.extract_strided_slice %135 {offsets = [0, 0], sizes = [2, 32], strides = [1, 1]} : vector<2x64xf32> to vector<2x32xf32>
    %137 = vector.extract_strided_slice %135 {offsets = [0, 32], sizes = [2, 32], strides = [1, 1]} : vector<2x64xf32> to vector<2x32xf32>
    %138 = vector.extract_strided_slice %126 {offsets = [0, 64], sizes = [2, 32], strides = [1, 1]} : vector<2x96xf32> to vector<2x32xf32>
    %139 = vector.extract_strided_slice %127 {offsets = [0, 64], sizes = [2, 32], strides = [1, 1]} : vector<2x96xf32> to vector<2x32xf32>
    %140 = arith.addf %139, %9 : vector<2x32xf32>
    %141 = arith.mulf %136, %140 : vector<2x32xf32>
    %142 = arith.addf %138, %141 : vector<2x32xf32>
    %143 = math.tanh %142 : vector<2x32xf32>
    %cst_27 = arith.constant 1.000000e+00 : f32
    %144 = vector.broadcast %cst_27 : f32 to vector<2x32xf32>
    %145 = arith.subf %144, %137 : vector<2x32xf32>
    %146 = arith.mulf %145, %143 : vector<2x32xf32>
    %147 = arith.mulf %137, %125 : vector<2x32xf32>
    %148 = arith.addf %146, %147 : vector<2x32xf32>
    %149 = vector.extract_strided_slice %5 {offsets = [12, 0], sizes = [2, 96], strides = [1, 1]} : vector<16x96xf32> to vector<2x96xf32>
    %cst_28 = arith.constant dense<0.000000e+00> : vector<2x96xf32>
    %150 = tpu.matmul %148, %6, %cst_28 {dimension_numbers = #tpu.dot_dimension_numbers<[1], [0], [0], [1], [0, 0, 1, 1], [], []>} : vector<2x32xf32>, vector<32x96xf32>, vector<2x96xf32> -> vector<2x96xf32>
    %151 = vector.extract_strided_slice %149 {offsets = [0, 0], sizes = [2, 64], strides = [1, 1]} : vector<2x96xf32> to vector<2x64xf32>
    %152 = vector.extract_strided_slice %150 {offsets = [0, 0], sizes = [2, 64], strides = [1, 1]} : vector<2x96xf32> to vector<2x64xf32>
    %153 = arith.addf %151, %152 : vector<2x64xf32>
    %154 = arith.negf %153 : vector<2x64xf32>
    %155 = math.exp %154 : vector<2x64xf32>
    %cst_29 = arith.constant 1.000000e+00 : f32
    %156 = vector.broadcast %cst_29 : f32 to vector<2x64xf32>
    %157 = arith.addf %156, %155 : vector<2x64xf32>
    %158 = arith.divf %156, %157 : vector<2x64xf32>
    %159 = vector.extract_strided_slice %158 {offsets = [0, 0], sizes = [2, 32], strides = [1, 1]} : vector<2x64xf32> to vector<2x32xf32>
    %160 = vector.extract_strided_slice %158 {offsets = [0, 32], sizes = [2, 32], strides = [1, 1]} : vector<2x64xf32> to vector<2x32xf32>
    %161 = vector.extract_strided_slice %149 {offsets = [0, 64], sizes = [2, 32], strides = [1, 1]} : vector<2x96xf32> to vector<2x32xf32>
    %162 = vector.extract_strided_slice %150 {offsets = [0, 64], sizes = [2, 32], strides = [1, 1]} : vector<2x96xf32> to vector<2x32xf32>
    %163 = arith.addf %162, %9 : vector<2x32xf32>
    %164 = arith.mulf %159, %163 : vector<2x32xf32>
    %165 = arith.addf %161, %164 : vector<2x32xf32>
    %166 = math.tanh %165 : vector<2x32xf32>
    %cst_30 = arith.constant 1.000000e+00 : f32
    %167 = vector.broadcast %cst_30 : f32 to vector<2x32xf32>
    %168 = arith.subf %167, %160 : vector<2x32xf32>
    %169 = arith.mulf %168, %166 : vector<2x32xf32>
    %170 = arith.mulf %160, %148 : vector<2x32xf32>
    %171 = arith.addf %169, %170 : vector<2x32xf32>
    %172 = vector.extract_strided_slice %5 {offsets = [14, 0], sizes = [2, 96], strides = [1, 1]} : vector<16x96xf32> to vector<2x96xf32>
    %cst_31 = arith.constant dense<0.000000e+00> : vector<2x96xf32>
    %173 = tpu.matmul %171, %6, %cst_31 {dimension_numbers = #tpu.dot_dimension_numbers<[1], [0], [0], [1], [0, 0, 1, 1], [], []>} : vector<2x32xf32>, vector<32x96xf32>, vector<2x96xf32> -> vector<2x96xf32>
    %174 = vector.extract_strided_slice %172 {offsets = [0, 0], sizes = [2, 64], strides = [1, 1]} : vector<2x96xf32> to vector<2x64xf32>
    %175 = vector.extract_strided_slice %173 {offsets = [0, 0], sizes = [2, 64], strides = [1, 1]} : vector<2x96xf32> to vector<2x64xf32>
    %176 = arith.addf %174, %175 : vector<2x64xf32>
    %177 = arith.negf %176 : vector<2x64xf32>
    %178 = math.exp %177 : vector<2x64xf32>
    %cst_32 = arith.constant 1.000000e+00 : f32
    %179 = vector.broadcast %cst_32 : f32 to vector<2x64xf32>
    %180 = arith.addf %179, %178 : vector<2x64xf32>
    %181 = arith.divf %179, %180 : vector<2x64xf32>
    %182 = vector.extract_strided_slice %181 {offsets = [0, 0], sizes = [2, 32], strides = [1, 1]} : vector<2x64xf32> to vector<2x32xf32>
    %183 = vector.extract_strided_slice %181 {offsets = [0, 32], sizes = [2, 32], strides = [1, 1]} : vector<2x64xf32> to vector<2x32xf32>
    %184 = vector.extract_strided_slice %172 {offsets = [0, 64], sizes = [2, 32], strides = [1, 1]} : vector<2x96xf32> to vector<2x32xf32>
    %185 = vector.extract_strided_slice %173 {offsets = [0, 64], sizes = [2, 32], strides = [1, 1]} : vector<2x96xf32> to vector<2x32xf32>
    %186 = arith.addf %185, %9 : vector<2x32xf32>
    %187 = arith.mulf %182, %186 : vector<2x32xf32>
    %188 = arith.addf %184, %187 : vector<2x32xf32>
    %189 = math.tanh %188 : vector<2x32xf32>
    %cst_33 = arith.constant 1.000000e+00 : f32
    %190 = vector.broadcast %cst_33 : f32 to vector<2x32xf32>
    %191 = arith.subf %190, %183 : vector<2x32xf32>
    %192 = arith.mulf %191, %189 : vector<2x32xf32>
    %193 = arith.mulf %183, %171 : vector<2x32xf32>
    %194 = arith.addf %192, %193 : vector<2x32xf32>
    %195 = tpu.concatenate %33, %56, %79, %102, %125, %148, %171, %194 in 1 : vector<2x32xf32>, vector<2x32xf32>, vector<2x32xf32>, vector<2x32xf32>, vector<2x32xf32>, vector<2x32xf32>, vector<2x32xf32>, vector<2x32xf32> -> vector<2x256xf32>
    %c0_34 = arith.constant 0 : index
    %c0_35 = arith.constant 0 : index
    %196 = vector.load %arg6[%c0_34, %c0_35] : memref<2x256xf32, #tpu.memory_space<vmem>>, vector<2x256xf32>
    tpu.vector_store %arg6[%c0_34, %c0_35], %195 {strides = array<i32>} : memref<2x256xf32, #tpu.memory_space<vmem>>, vector<2x256xf32>,
    return
  }
  func.func @transform_0(%arg0: i32) -> (i32, i32) {
    %c0_i32 = arith.constant 0 : i32
    %c0_i32_0 = arith.constant 0 : i32
    return %arg0, %c0_i32 : i32, i32
  }
  func.func @transform_1(%arg0: i32) -> (i32, i32) {
    %c0_i32 = arith.constant 0 : i32
    %c0_i32_0 = arith.constant 0 : i32
    %c0_i32_1 = arith.constant 0 : i32
    return %c0_i32, %c0_i32_0 : i32, i32
  }
  func.func @transform_2(%arg0: i32) -> (i32, i32) {
    %c0_i32 = arith.constant 0 : i32
    %c0_i32_0 = arith.constant 0 : i32
    %c0_i32_1 = arith.constant 0 : i32
    return %c0_i32, %c0_i32_0 : i32, i32
  }
  func.func @transform_3(%arg0: i32) -> (i32, i32) {
    %c0_i32 = arith.constant 0 : i32
    %c0_i32_0 = arith.constant 0 : i32
    %c0_i32_1 = arith.constant 0 : i32
    return %c0_i32, %c0_i32_0 : i32, i32
  }
  func.func @transform_4(%arg0: i32) -> (i32, i32) {
    %c0_i32 = arith.constant 0 : i32
    %c0_i32_0 = arith.constant 0 : i32
    %c0_i32_1 = arith.constant 0 : i32
    return %c0_i32, %c0_i32_0 : i32, i32
  }
  func.func @transform_5(%arg0: i32) -> (i32, i32) {
    %c0_i32 = arith.constant 0 : i32
    %c0_i32_0 = arith.constant 0 : i32
    return %arg0, %c0_i32 : i32, i32
  }
}

</mosaic_0001>

<llo_original>
// kernel: video_embedding_forward.1
$region0: #{video_embedding_forward.1}
  #allocation0 [shape = 'u32[]', space=smem, size = 0x4, offset = 0x4, fixed_abs, tag = 'smem constant byte address 0x4 - core index']
  #allocation1 [shape = 'u32[144,128]{1,0:T(1,128)}', space=vmem, size = 0x12000, scoped, tag = 'internal scratch']
  %s0 = inlined_call_operand.vmem [shape: f32[16,16], index: 0, kind: input, shape index: {}]
  %s1 = inlined_call_operand.hbm [shape: f32[16,96], index: 1, kind: input, shape index: {}]
  %s2 = inlined_call_operand.vmem [shape: f32[32,96], index: 2, kind: input, shape index: {}]
  %s3 = inlined_call_operand.vmem [shape: f32[1,96], index: 3, kind: input, shape index: {}]
  %s4 = inlined_call_operand.vmem [shape: f32[1,32], index: 4, kind: input, shape index: {}]
  %s5 = inlined_call_operand.vmem [shape: f32[2,256], index: 5, kind: output, shape index: {}]
  %s6 = sld [smem:[#allocation0]]
  $region34: #{video_embedding_forward.1} parent=0
    _
  %s8 = ssub.s32 1, %s6
  %s9 = scalar_select 0, %s8, %s6
  $region1: #{video_embedding_forward.1} parent=0
    #allocation2 [shape = 'u8[8192]{0}', space=vmem, size = 0x2000, scoped, tag = 'input window, operand 1, single buffered']
    #allocation3 [shape = 's32[1]{0}', space=sflag, size = 0x4, scoped, tag = 'scoped memory for video_embedding_forward.1']
    %10 = vsyncpa [#allocation3], 0
    // Predicated region
    $region2: #{video_embedding_forward.1} parent=1 // pred_check
      _
    $region3: #{video_embedding_forward.1} parent=1 // pred_check_branch
      %12 = sbr.rel (0) target = $region5
    $region4: #{video_embedding_forward.1} parent=1 // pred_region
      _
    $region5: #{video_embedding_forward.1} parent=1 // pred_fallthru
      _
    // Predicated region
    $region6: #{video_embedding_forward.1} parent=1 // pred_check
      _
    $region7: #{video_embedding_forward.1} parent=1 // pred_check_branch
      %14 = sbr.rel (0) target = $region9
    $region8: #{video_embedding_forward.1} parent=1 // pred_region
      %s16 = ssub.s32 256, 256
      %17 = vsyncadd [#allocation3], %s16
      %s18 = sshll.u32 [#allocation2], 4
      %s19 = int_to_ptr.vmem [resolvable:$true] %s18
      %24 = dma.hbm_to_vmem [thread:$0]  %s1, 256, %s19, [#allocation3], 128, 128, 8
    $region9: #{video_embedding_forward.1} parent=1 // pred_fallthru
      _
    // Predicated region
    $region10: #{video_embedding_forward.1} parent=1 // pred_check
      _
    $region11: #{video_embedding_forward.1} parent=1 // pred_check_branch
      %26 = sbr.rel (0) target = $region13
    $region12: #{video_embedding_forward.1} parent=1 // pred_region
      _
    $region13: #{video_embedding_forward.1} parent=1 // pred_fallthru
      _
    // Predicated region
    $region14: #{video_embedding_forward.1} parent=1 // pred_check
      _
    $region15: #{video_embedding_forward.1} parent=1 // pred_check_branch
      %28 = sbr.rel (0) target = $region17
    $region16: #{video_embedding_forward.1} parent=1 // pred_region
      _
    $region17: #{video_embedding_forward.1} parent=1 // pred_fallthru
      _
    // Predicated region
    $region18: #{video_embedding_forward.1} parent=1 // pred_check
      _
    $region19: #{video_embedding_forward.1} parent=1 // pred_check_branch
      %30 = sbr.rel (0) target = $region21
    $region20: #{video_embedding_forward.1} parent=1 // pred_region
      _
    $region21: #{video_embedding_forward.1} parent=1 // pred_fallthru
      _
    // Predicated region
    $region22: #{video_embedding_forward.1} parent=1 // pred_check
      _
    $region23: #{video_embedding_forward.1} parent=1 // pred_check_branch
      %32 = sbr.rel (0) target = $region25
    $region24: #{video_embedding_forward.1} parent=1 // pred_region
      %33 = dma.done [#allocation3], 256
    $region25: #{video_embedding_forward.1} parent=1 // pred_fallthru
      _
    %v34 = vld [vmem:[%s0] sm:$0xff]
    %v35 = vld [vmem:[%s0 + $0x8] sm:$0xff]
    %v36 = vld [vmem:[#allocation2] sm:$0xff]
    %v37 = vld [vmem:[#allocation2 + $0x8] sm:$0xff]
    %v38 = vld [vmem:[%s3] sm:$0x1]
    %v40 = vlaneseq
    %v41 = vshrl.u32 %v40, 7
    %v42 = vsub.s32 0, %v41
    %v43 = vrot.slane %v38, %v42
    %vm45 = vcmask 130048
    %v47 = vsel %vm45, %v34, 0
    %v50 = vsel %vm45, %v35, 0
    %52 = vmatprep.subr.mxu0 0.0
    %53 = vmatpush1.msra.mxu0 %v36
    %54 = vmatprep.subr.mxu0 0.0
    %55 = vmatpush1.msra.mxu0 %v37
    %56 = vmatprep.subr.mxu0 0.0
    %57 = vmatpush1.msra.mxu0 0.0
    %58 = vmatprep.subr.mxu0 0.0
    %59 = vmatpush1.msra.mxu0 0.0
    %60 = vmatprep.subr.mxu0 0.0
    %61 = vmatpush1.msra.mxu0 0.0
    %62 = vmatprep.subr.mxu0 0.0
    %63 = vmatpush1.msra.mxu0 0.0
    %64 = vmatprep.subr.mxu0 0.0
    %65 = vmatpush1.msra.mxu0 0.0
    %66 = vmatprep.subr.mxu0 0.0
    %67 = vmatpush1.msra.mxu0 0.0
    %68 = vmatprep.subr.mxu0 0.0
    %69 = vmatpush1.msra.mxu0 0.0
    %70 = vmatprep.subr.mxu0 0.0
    %71 = vmatpush1.msra.mxu0 0.0
    %72 = vmatprep.subr.mxu0 0.0
    %73 = vmatpush1.msra.mxu0 0.0
    %74 = vmatprep.subr.mxu0 0.0
    %75 = vmatpush1.msra.mxu0 0.0
    %76 = vmatprep.subr.mxu0 0.0
    %77 = vmatpush1.msra.mxu0 0.0
    %78 = vmatprep.subr.mxu0 0.0
    %79 = vmatpush1.msra.mxu0 0.0
    %80 = vmatprep.subr.mxu0 0.0
    %81 = vmatpush1.msra.mxu0 0.0
    %82 = vmatprep.subr.mxu0 0.0
    %83 = vmatpush1.msra.mxu0 0.0
    %84 = vmatprep.subr.mxu0 0.0
    %85 = vmatpush1.msra.mxu0 0.0
    %86 = vmatprep.subr.mxu0 0.0
    %87 = vmatpush1.msra.mxu0 0.0
    %88 = vmatprep.subr.mxu0 0.0
    %89 = vmatpush1.msra.mxu0 0.0
    %90 = vmatprep.subr.mxu0 0.0
    %91 = vmatpush1.msra.mxu0 0.0
    %92 = vmatprep.subr.mxu0 0.0
    %93 = vmatpush1.msra.mxu0 0.0
    %94 = vmatprep.subr.mxu0 0.0
    %95 = vmatpush1.msra.mxu0 0.0
    %96 = vmatprep.subr.mxu0 0.0
    %97 = vmatpush1.msra.mxu0 0.0
    %98 = vmatprep.subr.mxu0 0.0
    %99 = vmatpush1.msra.mxu0 0.0
    %100 = vmatprep.subr.mxu0 0.0
    %101 = vmatpush1.msra.mxu0 0.0
    %102 = vmatprep.subr.mxu0 0.0
    %103 = vmatpush1.msra.mxu0 0.0
    %104 = vmatprep.subr.mxu0 0.0
    %105 = vmatpush1.msra.mxu0 0.0
    %106 = vmatprep.subr.mxu0 0.0
    %107 = vmatpush1.msra.mxu0 0.0
    %108 = vmatprep.subr.mxu0 0.0
    %109 = vmatpush1.msra.mxu0 0.0
    %110 = vmatprep.subr.mxu0 0.0
    %111 = vmatpush1.msra.mxu0 0.0
    %112 = vmatprep.subr.mxu0 0.0
    %113 = vmatpush1.msra.mxu0 0.0
    %114 = vmatprep.subr.mxu0 0.0
    %115 = vmatpush1.msra.mxu0 0.0
    %116 = vmatprep.mubr.f32.mxu0 0.0
    %117 = vmatmul.mubr.f32.gmra.mrb[0].mxu0 %v47
    %v118 = vpop.f32.mrb[0].mxu0
    %v119 = vadd.f32 %v43, %v118
    %v120 = vpop.f32.mrb[0].mxu0
    %121 = vmatprep.mubr.f32.mxu0 0.0
    %122 = vmatmul.mubr.f32.gmra.mrb[0].mxu0 %v50
    %v123 = vpop.f32.mrb[0].mxu0
    %v124 = vadd.f32 %v43, %v123
    %v125 = vpop.f32.mrb[0].mxu0
    %126 = vdwg.mxu0
    %v127 = vld [vmem:[%s2] sm:$0xff]
    %v128 = vld [vmem:[%s2 + $0x8] sm:$0xff]
    %v129 = vld [vmem:[%s2 + $0x10] sm:$0xff]
    %v130 = vld [vmem:[%s2 + $0x18] sm:$0xff]
    %v131 = vld [vmem:[%s4] sm:$0x1]
    %v133 = vlaneseq
    %v134 = vshrl.u32 %v133, 7
    %v135 = vsub.s32 0, %v134
    %v136 = vrot.slane %v131, %v135
    %vm137 = vcmask 261120
    %v139 = vsel %vm137, 0.0, 0
    %141 = vmatprep.subr.mxu0 0.0
    %142 = vmatpush1.msra.mxu0 %v127
    %143 = vmatprep.subr.mxu0 0.0
    %144 = vmatpush1.msra.mxu0 %v128
    %145 = vmatprep.subr.mxu0 0.0
    %146 = vmatpush1.msra.mxu0 %v129
    %147 = vmatprep.subr.mxu0 0.0
    %148 = vmatpush1.msra.mxu0 %v130
    %149 = vmatprep.subr.mxu0 0.0
    %150 = vmatpush1.msra.mxu0 0.0
    %151 = vmatprep.subr.mxu0 0.0
    %152 = vmatpush1.msra.mxu0 0.0
    %153 = vmatprep.subr.mxu0 0.0
    %154 = vmatpush1.msra.mxu0 0.0
    %155 = vmatprep.subr.mxu0 0.0
    %156 = vmatpush1.msra.mxu0 0.0
    %157 = vmatprep.subr.mxu0 0.0
    %158 = vmatpush1.msra.mxu0 0.0
    %159 = vmatprep.subr.mxu0 0.0
    %160 = vmatpush1.msra.mxu0 0.0
    %161 = vmatprep.subr.mxu0 0.0
    %162 = vmatpush1.msra.mxu0 0.0
    %163 = vmatprep.subr.mxu0 0.0
    %164 = vmatpush1.msra.mxu0 0.0
    %165 = vmatprep.subr.mxu0 0.0
    %166 = vmatpush1.msra.mxu0 0.0
    %167 = vmatprep.subr.mxu0 0.0
    %168 = vmatpush1.msra.mxu0 0.0
    %169 = vmatprep.subr.mxu0 0.0
    %170 = vmatpush1.msra.mxu0 0.0
    %171 = vmatprep.subr.mxu0 0.0
    %172 = vmatpush1.msra.mxu0 0.0
    %173 = vmatprep.subr.mxu0 0.0
    %174 = vmatpush1.msra.mxu0 0.0
    %175 = vmatprep.subr.mxu0 0.0
    %176 = vmatpush1.msra.mxu0 0.0
    %177 = vmatprep.subr.mxu0 0.0
    %178 = vmatpush1.msra.mxu0 0.0
    %179 = vmatprep.subr.mxu0 0.0
    %180 = vmatpush1.msra.mxu0 0.0
    %181 = vmatprep.subr.mxu0 0.0
    %182 = vmatpush1.msra.mxu0 0.0
    %183 = vmatprep.subr.mxu0 0.0
    %184 = vmatpush1.msra.mxu0 0.0
    %185 = vmatprep.subr.mxu0 0.0
    %186 = vmatpush1.msra.mxu0 0.0
    %187 = vmatprep.subr.mxu0 0.0
    %188 = vmatpush1.msra.mxu0 0.0
    %189 = vmatprep.subr.mxu0 0.0
    %190 = vmatpush1.msra.mxu0 0.0
    %191 = vmatprep.subr.mxu0 0.0
    %192 = vmatpush1.msra.mxu0 0.0
    %193 = vmatprep.subr.mxu0 0.0
    %194 = vmatpush1.msra.mxu0 0.0
    %195 = vmatprep.subr.mxu0 0.0
    %196 = vmatpush1.msra.mxu0 0.0
    %197 = vmatprep.subr.mxu0 0.0
    %198 = vmatpush1.msra.mxu0 0.0
    %199 = vmatprep.subr.mxu0 0.0
    %200 = vmatpush1.msra.mxu0 0.0
    %201 = vmatprep.subr.mxu0 0.0
    %202 = vmatpush1.msra.mxu0 0.0
    %203 = vmatprep.subr.mxu0 0.0
    %204 = vmatpush1.msra.mxu0 0.0
    %205 = vmatprep.mubr.f32.mxu0 0.0
    %206 = vmatmul.mubr.f32.gmra.mrb[0].mxu0 %v139
    %v207 = vpop.f32.mrb[0].mxu0
    %v208 = vadd.f32 0.0, %v207
    %v209 = vpop.f32.mrb[0].mxu0
    %210 = vdwg.mxu0
    %v211 = vadd.f32 %v119, %v208
    %v212 = vxor.u32 %v211, 2147483648
    %v213 = vmul.f32 %v212, 1.442695
    %v214 = vpow.pop %v213
    %v215 = vadd.f32 %v214, 1.0
    %v216 = vrcp.pop %v215
    %v217 = vmul.f32 1.0, %v216
    %218 = vrot.lane.b32.xlu0 %v136, 64
    %v219 = vpop.permute.xlu0 %218
    %v221 = vadd.f32 %v208, %v219
    %223 = vrot.lane.b32.xlu0 %v221, 64
    %v224 = vpop.permute.xlu0 %223
    %v226 = vmul.f32 %v217, %v224
    %228 = vrot.lane.b32.xlu0 %v226, 64
    %v229 = vpop.permute.xlu0 %228
    %v231 = vadd.f32 %v119, %v229
    %v232 = vtanh.pop %v231
    %v233 = vsub.f32 1.0, %v217
    %235 = vrot.lane.b32.xlu0 %v232, 96
    %v236 = vpop.permute.xlu0 %235
    %v238 = vmul.f32 %v233, %v236
    %v239 = vmul.f32 %v217, 0.0
    %v240 = vadd.f32 %v238, %v239
    %242 = vrot.lane.b32.xlu0 %v240, 96
    %v243 = vpop.permute.xlu0 %242
    %v244 = vsel %vm137, %v243, 0
    %246 = vmatprep.subr.mxu0 0.0
    %247 = vmatpush1.msra.mxu0 %v127
    %248 = vmatprep.subr.mxu0 0.0
    %249 = vmatpush1.msra.mxu0 %v128
    %250 = vmatprep.subr.mxu0 0.0
    %251 = vmatpush1.msra.mxu0 %v129
    %252 = vmatprep.subr.mxu0 0.0
    %253 = vmatpush1.msra.mxu0 %v130
    %254 = vmatprep.subr.mxu0 0.0
    %255 = vmatpush1.msra.mxu0 0.0
    %256 = vmatprep.subr.mxu0 0.0
    %257 = vmatpush1.msra.mxu0 0.0
    %258 = vmatprep.subr.mxu0 0.0
    %259 = vmatpush1.msra.mxu0 0.0
    %260 = vmatprep.subr.mxu0 0.0
    %261 = vmatpush1.msra.mxu0 0.0
    %262 = vmatprep.subr.mxu0 0.0
    %263 = vmatpush1.msra.mxu0 0.0
    %264 = vmatprep.subr.mxu0 0.0
    %265 = vmatpush1.msra.mxu0 0.0
    %266 = vmatprep.subr.mxu0 0.0
    %267 = vmatpush1.msra.mxu0 0.0
    %268 = vmatprep.subr.mxu0 0.0
    %269 = vmatpush1.msra.mxu0 0.0
    %270 = vmatprep.subr.mxu0 0.0
    %271 = vmatpush1.msra.mxu0 0.0
    %272 = vmatprep.subr.mxu0 0.0
    %273 = vmatpush1.msra.mxu0 0.0
    %274 = vmatprep.subr.mxu0 0.0
    %275 = vmatpush1.msra.mxu0 0.0
    %276 = vmatprep.subr.mxu0 0.0
    %277 = vmatpush1.msra.mxu0 0.0
    %278 = vmatprep.subr.mxu0 0.0
    %279 = vmatpush1.msra.mxu0 0.0
    %280 = vmatprep.subr.mxu0 0.0
    %281 = vmatpush1.msra.mxu0 0.0
    %282 = vmatprep.subr.mxu0 0.0
    %283 = vmatpush1.msra.mxu0 0.0
    %284 = vmatprep.subr.mxu0 0.0
    %285 = vmatpush1.msra.mxu0 0.0
    %286 = vmatprep.subr.mxu0 0.0
    %287 = vmatpush1.msra.mxu0 0.0
    %288 = vmatprep.subr.mxu0 0.0
    %289 = vmatpush1.msra.mxu0 0.0
    %290 = vmatprep.subr.mxu0 0.0
    %291 = vmatpush1.msra.mxu0 0.0
    %292 = vmatprep.subr.mxu0 0.0
    %293 = vmatpush1.msra.mxu0 0.0
    %294 = vmatprep.subr.mxu0 0.0
    %295 = vmatpush1.msra.mxu0 0.0
    %296 = vmatprep.subr.mxu0 0.0
    %297 = vmatpush1.msra.mxu0 0.0
    %298 = vmatprep.subr.mxu0 0.0
    %299 = vmatpush1.msra.mxu0 0.0
    %300 = vmatprep.subr.mxu0 0.0
    %301 = vmatpush1.msra.mxu0 0.0
    %302 = vmatprep.subr.mxu0 0.0
    %303 = vmatpush1.msra.mxu0 0.0
    %304 = vmatprep.subr.mxu0 0.0
    %305 = vmatpush1.msra.mxu0 0.0
    %306 = vmatprep.subr.mxu0 0.0
    %307 = vmatpush1.msra.mxu0 0.0
    %308 = vmatprep.subr.mxu0 0.0
    %309 = vmatpush1.msra.mxu0 0.0
    %310 = vmatprep.mubr.f32.mxu0 0.0
    %311 = vmatmul.mubr.f32.gmra.mrb[0].mxu0 %v244
    %v312 = vpop.f32.mrb[0].mxu0
    %v313 = vadd.f32 0.0, %v312
    %v314 = vpop.f32.mrb[0].mxu0
    %315 = vdwg.mxu0
    %v317 = vrot.slane %v313, 6
    %v319 = vadd.f32 %v119, %v317
    %v320 = vxor.u32 %v319, 2147483648
    %v321 = vmul.f32 %v320, 1.442695
    %v322 = vpow.pop %v321
    %v323 = vadd.f32 %v322, 1.0
    %v324 = vrcp.pop %v323
    %v325 = vmul.f32 1.0, %v324
    %v326 = vadd.f32 %v313, %v219
    %v328 = vrot.slane %v326, 6
    %329 = vrot.lane.b32.xlu0 %v328, 64
    %v330 = vpop.permute.xlu0 %329
    %v332 = vmul.f32 %v325, %v330
    %334 = vrot.lane.b32.xlu0 %v332, 64
    %v335 = vpop.permute.xlu0 %334
    %v337 = vadd.f32 %v119, %v335
    %v338 = vtanh.pop %v337
    %v339 = vsub.f32 1.0, %v325
    %341 = vrot.lane.b32.xlu0 %v338, 96
    %v342 = vpop.permute.xlu0 %341
    %v344 = vmul.f32 %v339, %v342
    %v345 = vrot.slane %v240, 6
    %v347 = vmul.f32 %v325, %v345
    %v348 = vadd.f32 %v344, %v347
    %v350 = vrot.slane %v348, 2
    %351 = vrot.lane.b32.xlu0 %v350, 96
    %v352 = vpop.permute.xlu0 %351
    %v353 = vsel %vm137, %v352, 0
    %355 = vmatprep.subr.mxu0 0.0
    %356 = vmatpush1.msra.mxu0 %v127
    %357 = vmatprep.subr.mxu0 0.0
    %358 = vmatpush1.msra.mxu0 %v128
    %359 = vmatprep.subr.mxu0 0.0
    %360 = vmatpush1.msra.mxu0 %v129
    %361 = vmatprep.subr.mxu0 0.0
    %362 = vmatpush1.msra.mxu0 %v130
    %363 = vmatprep.subr.mxu0 0.0
    %364 = vmatpush1.msra.mxu0 0.0
    %365 = vmatprep.subr.mxu0 0.0
    %366 = vmatpush1.msra.mxu0 0.0
    %367 = vmatprep.subr.mxu0 0.0
    %368 = vmatpush1.msra.mxu0 0.0
    %369 = vmatprep.subr.mxu0 0.0
    %370 = vmatpush1.msra.mxu0 0.0
    %371 = vmatprep.subr.mxu0 0.0
    %372 = vmatpush1.msra.mxu0 0.0
    %373 = vmatprep.subr.mxu0 0.0
    %374 = vmatpush1.msra.mxu0 0.0
    %375 = vmatprep.subr.mxu0 0.0
    %376 = vmatpush1.msra.mxu0 0.0
    %377 = vmatprep.subr.mxu0 0.0
    %378 = vmatpush1.msra.mxu0 0.0
    %379 = vmatprep.subr.mxu0 0.0
    %380 = vmatpush1.msra.mxu0 0.0
    %381 = vmatprep.subr.mxu0 0.0
    %382 = vmatpush1.msra.mxu0 0.0
    %383 = vmatprep.subr.mxu0 0.0
    %384 = vmatpush1.msra.mxu0 0.0
    %385 = vmatprep.subr.mxu0 0.0
    %386 = vmatpush1.msra.mxu0 0.0
    %387 = vmatprep.subr.mxu0 0.0
    %388 = vmatpush1.msra.mxu0 0.0
    %389 = vmatprep.subr.mxu0 0.0
    %390 = vmatpush1.msra.mxu0 0.0
    %391 = vmatprep.subr.mxu0 0.0
    %392 = vmatpush1.msra.mxu0 0.0
    %393 = vmatprep.subr.mxu0 0.0
    %394 = vmatpush1.msra.mxu0 0.0
    %395 = vmatprep.subr.mxu0 0.0
    %396 = vmatpush1.msra.mxu0 0.0
    %397 = vmatprep.subr.mxu0 0.0
    %398 = vmatpush1.msra.mxu0 0.0
    %399 = vmatprep.subr.mxu0 0.0
    %400 = vmatpush1.msra.mxu0 0.0
    %401 = vmatprep.subr.mxu0 0.0
    %402 = vmatpush1.msra.mxu0 0.0
    %403 = vmatprep.subr.mxu0 0.0
    %404 = vmatpush1.msra.mxu0 0.0
    %405 = vmatprep.subr.mxu0 0.0
    %406 = vmatpush1.msra.mxu0 0.0
    %407 = vmatprep.subr.mxu0 0.0
    %408 = vmatpush1.msra.mxu0 0.0
    %409 = vmatprep.subr.mxu0 0.0
    %410 = vmatpush1.msra.mxu0 0.0
    %411 = vmatprep.subr.mxu0 0.0
    %412 = vmatpush1.msra.mxu0 0.0
    %413 = vmatprep.subr.mxu0 0.0
    %414 = vmatpush1.msra.mxu0 0.0
    %415 = vmatprep.subr.mxu0 0.0
    %416 = vmatpush1.msra.mxu0 0.0
    %417 = vmatprep.subr.mxu0 0.0
    %418 = vmatpush1.msra.mxu0 0.0
    %419 = vmatprep.mubr.f32.mxu0 0.0
    %420 = vmatmul.mubr.f32.gmra.mrb[0].mxu0 %v353
    %v421 = vpop.f32.mrb[0].mxu0
    %v422 = vadd.f32 0.0, %v421
    %v423 = vpop.f32.mrb[0].mxu0
    %424 = vdwg.mxu0
    %v426 = vrot.slane %v422, 4
    %v428 = vadd.f32 %v119, %v426
    %v429 = vxor.u32 %v428, 2147483648
    %v430 = vmul.f32 %v429, 1.442695
    %v431 = vpow.pop %v430
    %v432 = vadd.f32 %v431, 1.0
    %v433 = vrcp.pop %v432
    %v434 = vmul.f32 1.0, %v433
    %v435 = vadd.f32 %v422, %v219
    %v437 = vrot.slane %v435, 4
    %438 = vrot.lane.b32.xlu0 %v437, 64
    %v439 = vpop.permute.xlu0 %438
    %v441 = vmul.f32 %v434, %v439
    %443 = vrot.lane.b32.xlu0 %v441, 64
    %v444 = vpop.permute.xlu0 %443
    %v446 = vadd.f32 %v119, %v444
    %v447 = vtanh.pop %v446
    %v448 = vsub.f32 1.0, %v434
    %450 = vrot.lane.b32.xlu0 %v447, 96
    %v451 = vpop.permute.xlu0 %450
    %v453 = vmul.f32 %v448, %v451
    %v454 = vrot.slane %v348, 6
    %v456 = vmul.f32 %v434, %v454
    %v457 = vadd.f32 %v453, %v456
    %v459 = vrot.slane %v457, 4
    %460 = vrot.lane.b32.xlu0 %v459, 96
    %v461 = vpop.permute.xlu0 %460
    %v462 = vsel %vm137, %v461, 0
    %464 = vmatprep.subr.mxu0 0.0
    %465 = vmatpush1.msra.mxu0 %v127
    %466 = vmatprep.subr.mxu0 0.0
    %467 = vmatpush1.msra.mxu0 %v128
    %468 = vmatprep.subr.mxu0 0.0
    %469 = vmatpush1.msra.mxu0 %v129
    %470 = vmatprep.subr.mxu0 0.0
    %471 = vmatpush1.msra.mxu0 %v130
    %472 = vmatprep.subr.mxu0 0.0
    %473 = vmatpush1.msra.mxu0 0.0
    %474 = vmatprep.subr.mxu0 0.0
    %475 = vmatpush1.msra.mxu0 0.0
    %476 = vmatprep.subr.mxu0 0.0
    %477 = vmatpush1.msra.mxu0 0.0
    %478 = vmatprep.subr.mxu0 0.0
    %479 = vmatpush1.msra.mxu0 0.0
    %480 = vmatprep.subr.mxu0 0.0
    %481 = vmatpush1.msra.mxu0 0.0
    %482 = vmatprep.subr.mxu0 0.0
    %483 = vmatpush1.msra.mxu0 0.0
    %484 = vmatprep.subr.mxu0 0.0
    %485 = vmatpush1.msra.mxu0 0.0
    %486 = vmatprep.subr.mxu0 0.0
    %487 = vmatpush1.msra.mxu0 0.0
    %488 = vmatprep.subr.mxu0 0.0
    %489 = vmatpush1.msra.mxu0 0.0
    %490 = vmatprep.subr.mxu0 0.0
    %491 = vmatpush1.msra.mxu0 0.0
    %492 = vmatprep.subr.mxu0 0.0
    %493 = vmatpush1.msra.mxu0 0.0
    %494 = vmatprep.subr.mxu0 0.0
    %495 = vmatpush1.msra.mxu0 0.0
    %496 = vmatprep.subr.mxu0 0.0
    %497 = vmatpush1.msra.mxu0 0.0
    %498 = vmatprep.subr.mxu0 0.0
    %499 = vmatpush1.msra.mxu0 0.0
    %500 = vmatprep.subr.mxu0 0.0
    %501 = vmatpush1.msra.mxu0 0.0
    %502 = vmatprep.subr.mxu0 0.0
    %503 = vmatpush1.msra.mxu0 0.0
    %504 = vmatprep.subr.mxu0 0.0
    %505 = vmatpush1.msra.mxu0 0.0
    %506 = vmatprep.subr.mxu0 0.0
    %507 = vmatpush1.msra.mxu0 0.0
    %508 = vmatprep.subr.mxu0 0.0
    %509 = vmatpush1.msra.mxu0 0.0
    %510 = vmatprep.subr.mxu0 0.0
    %511 = vmatpush1.msra.mxu0 0.0
    %512 = vmatprep.subr.mxu0 0.0
    %513 = vmatpush1.msra.mxu0 0.0
    %514 = vmatprep.subr.mxu0 0.0
    %515 = vmatpush1.msra.mxu0 0.0
    %516 = vmatprep.subr.mxu0 0.0
    %517 = vmatpush1.msra.mxu0 0.0
    %518 = vmatprep.subr.mxu0 0.0
    %519 = vmatpush1.msra.mxu0 0.0
    %520 = vmatprep.subr.mxu0 0.0
    %521 = vmatpush1.msra.mxu0 0.0
    %522 = vmatprep.subr.mxu0 0.0
    %523 = vmatpush1.msra.mxu0 0.0
    %524 = vmatprep.subr.mxu0 0.0
    %525 = vmatpush1.msra.mxu0 0.0
    %526 = vmatprep.subr.mxu0 0.0
    %527 = vmatpush1.msra.mxu0 0.0
    %528 = vmatprep.mubr.f32.mxu0 0.0
    %529 = vmatmul.mubr.f32.gmra.mrb[0].mxu0 %v462
    %v530 = vpop.f32.mrb[0].mxu0
    %v531 = vadd.f32 0.0, %v530
    %v532 = vpop.f32.mrb[0].mxu0
    %533 = vdwg.mxu0
    %v535 = vrot.slane %v531, 2
    %v537 = vadd.f32 %v119, %v535
    %v538 = vxor.u32 %v537, 2147483648
    %v539 = vmul.f32 %v538, 1.442695
    %v540 = vpow.pop %v539
    %v541 = vadd.f32 %v540, 1.0
    %v542 = vrcp.pop %v541
    %v543 = vmul.f32 1.0, %v542
    %v544 = vadd.f32 %v531, %v219
    %v546 = vrot.slane %v544, 2
    %547 = vrot.lane.b32.xlu0 %v546, 64
    %v548 = vpop.permute.xlu0 %547
    %v550 = vmul.f32 %v543, %v548
    %552 = vrot.lane.b32.xlu0 %v550, 64
    %v553 = vpop.permute.xlu0 %552
    %v555 = vadd.f32 %v119, %v553
    %v556 = vtanh.pop %v555
    %v557 = vsub.f32 1.0, %v543
    %559 = vrot.lane.b32.xlu0 %v556, 96
    %v560 = vpop.permute.xlu0 %559
    %v562 = vmul.f32 %v557, %v560
    %v563 = vrot.slane %v457, 6
    %v565 = vmul.f32 %v543, %v563
    %v566 = vadd.f32 %v562, %v565
    %v568 = vrot.slane %v566, 6
    %569 = vrot.lane.b32.xlu0 %v568, 96
    %v570 = vpop.permute.xlu0 %569
    %v571 = vsel %vm137, %v570, 0
    %573 = vmatprep.subr.mxu0 0.0
    %574 = vmatpush1.msra.mxu0 %v127
    %575 = vmatprep.subr.mxu0 0.0
    %576 = vmatpush1.msra.mxu0 %v128
    %577 = vmatprep.subr.mxu0 0.0
    %578 = vmatpush1.msra.mxu0 %v129
    %579 = vmatprep.subr.mxu0 0.0
    %580 = vmatpush1.msra.mxu0 %v130
    %581 = vmatprep.subr.mxu0 0.0
    %582 = vmatpush1.msra.mxu0 0.0
    %583 = vmatprep.subr.mxu0 0.0
    %584 = vmatpush1.msra.mxu0 0.0
    %585 = vmatprep.subr.mxu0 0.0
    %586 = vmatpush1.msra.mxu0 0.0
    %587 = vmatprep.subr.mxu0 0.0
    %588 = vmatpush1.msra.mxu0 0.0
    %589 = vmatprep.subr.mxu0 0.0
    %590 = vmatpush1.msra.mxu0 0.0
    %591 = vmatprep.subr.mxu0 0.0
    %592 = vmatpush1.msra.mxu0 0.0
    %593 = vmatprep.subr.mxu0 0.0
    %594 = vmatpush1.msra.mxu0 0.0
    %595 = vmatprep.subr.mxu0 0.0
    %596 = vmatpush1.msra.mxu0 0.0
    %597 = vmatprep.subr.mxu0 0.0
    %598 = vmatpush1.msra.mxu0 0.0
    %599 = vmatprep.subr.mxu0 0.0
    %600 = vmatpush1.msra.mxu0 0.0
    %601 = vmatprep.subr.mxu0 0.0
    %602 = vmatpush1.msra.mxu0 0.0
    %603 = vmatprep.subr.mxu0 0.0
    %604 = vmatpush1.msra.mxu0 0.0
    %605 = vmatprep.subr.mxu0 0.0
    %606 = vmatpush1.msra.mxu0 0.0
    %607 = vmatprep.subr.mxu0 0.0
    %608 = vmatpush1.msra.mxu0 0.0
    %609 = vmatprep.subr.mxu0 0.0
    %610 = vmatpush1.msra.mxu0 0.0
    %611 = vmatprep.subr.mxu0 0.0
    %612 = vmatpush1.msra.mxu0 0.0
    %613 = vmatprep.subr.mxu0 0.0
    %614 = vmatpush1.msra.mxu0 0.0
    %615 = vmatprep.subr.mxu0 0.0
    %616 = vmatpush1.msra.mxu0 0.0
    %617 = vmatprep.subr.mxu0 0.0
    %618 = vmatpush1.msra.mxu0 0.0
    %619 = vmatprep.subr.mxu0 0.0
    %620 = vmatpush1.msra.mxu0 0.0
    %621 = vmatprep.subr.mxu0 0.0
    %622 = vmatpush1.msra.mxu0 0.0
    %623 = vmatprep.subr.mxu0 0.0
    %624 = vmatpush1.msra.mxu0 0.0
    %625 = vmatprep.subr.mxu0 0.0
    %626 = vmatpush1.msra.mxu0 0.0
    %627 = vmatprep.subr.mxu0 0.0
    %628 = vmatpush1.msra.mxu0 0.0
    %629 = vmatprep.subr.mxu0 0.0
    %630 = vmatpush1.msra.mxu0 0.0
    %631 = vmatprep.subr.mxu0 0.0
    %632 = vmatpush1.msra.mxu0 0.0
    %633 = vmatprep.subr.mxu0 0.0
    %634 = vmatpush1.msra.mxu0 0.0
    %635 = vmatprep.subr.mxu0 0.0
    %636 = vmatpush1.msra.mxu0 0.0
    %637 = vmatprep.mubr.f32.mxu0 0.0
    %638 = vmatmul.mubr.f32.gmra.mrb[0].mxu0 %v571
    %v639 = vpop.f32.mrb[0].mxu0
    %v640 = vadd.f32 0.0, %v639
    %v641 = vpop.f32.mrb[0].mxu0
    %642 = vdwg.mxu0
    %v643 = vadd.f32 %v124, %v640
    %v644 = vxor.u32 %v643, 2147483648
    %v645 = vmul.f32 %v644, 1.442695
    %v646 = vpow.pop %v645
    %v647 = vadd.f32 %v646, 1.0
    %v648 = vrcp.pop %v647
    %v649 = vmul.f32 1.0, %v648
    %v650 = vadd.f32 %v640, %v219
    %652 = vrot.lane.b32.xlu0 %v650, 64
    %v653 = vpop.permute.xlu0 %652
    %v655 = vmul.f32 %v649, %v653
    %657 = vrot.lane.b32.xlu0 %v655, 64
    %v658 = vpop.permute.xlu0 %657
    %v660 = vadd.f32 %v124, %v658
    %v661 = vtanh.pop %v660
    %v662 = vsub.f32 1.0, %v649
    %664 = vrot.lane.b32.xlu0 %v661, 96
    %v665 = vpop.permute.xlu0 %664
    %v667 = vmul.f32 %v662, %v665
    %v669 = vmul.f32 %v649, %v568
    %v670 = vadd.f32 %v667, %v669
    %672 = vrot.lane.b32.xlu0 %v670, 96
    %v673 = vpop.permute.xlu0 %672
    %v674 = vsel %vm137, %v673, 0
    %676 = vmatprep.subr.mxu0 0.0
    %677 = vmatpush1.msra.mxu0 %v127
    %678 = vmatprep.subr.mxu0 0.0
    %679 = vmatpush1.msra.mxu0 %v128
    %680 = vmatprep.subr.mxu0 0.0
    %681 = vmatpush1.msra.mxu0 %v129
    %682 = vmatprep.subr.mxu0 0.0
    %683 = vmatpush1.msra.mxu0 %v130
    %684 = vmatprep.subr.mxu0 0.0
    %685 = vmatpush1.msra.mxu0 0.0
    %686 = vmatprep.subr.mxu0 0.0
    %687 = vmatpush1.msra.mxu0 0.0
    %688 = vmatprep.subr.mxu0 0.0
    %689 = vmatpush1.msra.mxu0 0.0
    %690 = vmatprep.subr.mxu0 0.0
    %691 = vmatpush1.msra.mxu0 0.0
    %692 = vmatprep.subr.mxu0 0.0
    %693 = vmatpush1.msra.mxu0 0.0
    %694 = vmatprep.subr.mxu0 0.0
    %695 = vmatpush1.msra.mxu0 0.0
    %696 = vmatprep.subr.mxu0 0.0
    %697 = vmatpush1.msra.mxu0 0.0
    %698 = vmatprep.subr.mxu0 0.0
    %699 = vmatpush1.msra.mxu0 0.0
    %700 = vmatprep.subr.mxu0 0.0
    %701 = vmatpush1.msra.mxu0 0.0
    %702 = vmatprep.subr.mxu0 0.0
    %703 = vmatpush1.msra.mxu0 0.0
    %704 = vmatprep.subr.mxu0 0.0
    %705 = vmatpush1.msra.mxu0 0.0
    %706 = vmatprep.subr.mxu0 0.0
    %707 = vmatpush1.msra.mxu0 0.0
    %708 = vmatprep.subr.mxu0 0.0
    %709 = vmatpush1.msra.mxu0 0.0
    %710 = vmatprep.subr.mxu0 0.0
    %711 = vmatpush1.msra.mxu0 0.0
    %712 = vmatprep.subr.mxu0 0.0
    %713 = vmatpush1.msra.mxu0 0.0
    %714 = vmatprep.subr.mxu0 0.0
    %715 = vmatpush1.msra.mxu0 0.0
    %716 = vmatprep.subr.mxu0 0.0
    %717 = vmatpush1.msra.mxu0 0.0
    %718 = vmatprep.subr.mxu0 0.0
    %719 = vmatpush1.msra.mxu0 0.0
    %720 = vmatprep.subr.mxu0 0.0
    %721 = vmatpush1.msra.mxu0 0.0
    %722 = vmatprep.subr.mxu0 0.0
    %723 = vmatpush1.msra.mxu0 0.0
    %724 = vmatprep.subr.mxu0 0.0
    %725 = vmatpush1.msra.mxu0 0.0
    %726 = vmatprep.subr.mxu0 0.0
    %727 = vmatpush1.msra.mxu0 0.0
    %728 = vmatprep.subr.mxu0 0.0
    %729 = vmatpush1.msra.mxu0 0.0
    %730 = vmatprep.subr.mxu0 0.0
    %731 = vmatpush1.msra.mxu0 0.0
    %732 = vmatprep.subr.mxu0 0.0
    %733 = vmatpush1.msra.mxu0 0.0
    %734 = vmatprep.subr.mxu0 0.0
    %735 = vmatpush1.msra.mxu0 0.0
    %736 = vmatprep.subr.mxu0 0.0
    %737 = vmatpush1.msra.mxu0 0.0
    %738 = vmatprep.subr.mxu0 0.0
    %739 = vmatpush1.msra.mxu0 0.0
    %740 = vmatprep.mubr.f32.mxu0 0.0
    %741 = vmatmul.mubr.f32.gmra.mrb[0].mxu0 %v674
    %v742 = vpop.f32.mrb[0].mxu0
    %v743 = vadd.f32 0.0, %v742
    %v744 = vpop.f32.mrb[0].mxu0
    %745 = vdwg.mxu0
    %v747 = vrot.slane %v743, 6
    %v749 = vadd.f32 %v124, %v747
    %v750 = vxor.u32 %v749, 2147483648
    %v751 = vmul.f32 %v750, 1.442695
    %v752 = vpow.pop %v751
    %v753 = vadd.f32 %v752, 1.0
    %v754 = vrcp.pop %v753
    %v755 = vmul.f32 1.0, %v754
    %v756 = vadd.f32 %v743, %v219
    %v758 = vrot.slane %v756, 6
    %759 = vrot.lane.b32.xlu0 %v758, 64
    %v760 = vpop.permute.xlu0 %759
    %v762 = vmul.f32 %v755, %v760
    %764 = vrot.lane.b32.xlu0 %v762, 64
    %v765 = vpop.permute.xlu0 %764
    %v767 = vadd.f32 %v124, %v765
    %v768 = vtanh.pop %v767
    %v769 = vsub.f32 1.0, %v755
    %771 = vrot.lane.b32.xlu0 %v768, 96
    %v772 = vpop.permute.xlu0 %771
    %v774 = vmul.f32 %v769, %v772
    %v775 = vrot.slane %v670, 6
    %v777 = vmul.f32 %v755, %v775
    %v778 = vadd.f32 %v774, %v777
    %v780 = vrot.slane %v778, 2
    %781 = vrot.lane.b32.xlu0 %v780, 96
    %v782 = vpop.permute.xlu0 %781
    %v783 = vsel %vm137, %v782, 0
    %785 = vmatprep.subr.mxu0 0.0
    %786 = vmatpush1.msra.mxu0 %v127
    %787 = vmatprep.subr.mxu0 0.0
    %788 = vmatpush1.msra.mxu0 %v128
    %789 = vmatprep.subr.mxu0 0.0
    %790 = vmatpush1.msra.mxu0 %v129
    %791 = vmatprep.subr.mxu0 0.0
    %792 = vmatpush1.msra.mxu0 %v130
    %793 = vmatprep.subr.mxu0 0.0
    %794 = vmatpush1.msra.mxu0 0.0
    %795 = vmatprep.subr.mxu0 0.0
    %796 = vmatpush1.msra.mxu0 0.0
    %797 = vmatprep.subr.mxu0 0.0
    %798 = vmatpush1.msra.mxu0 0.0
    %799 = vmatprep.subr.mxu0 0.0
    %800 = vmatpush1.msra.mxu0 0.0
    %801 = vmatprep.subr.mxu0 0.0
    %802 = vmatpush1.msra.mxu0 0.0
    %803 = vmatprep.subr.mxu0 0.0
    %804 = vmatpush1.msra.mxu0 0.0
    %805 = vmatprep.subr.mxu0 0.0
    %806 = vmatpush1.msra.mxu0 0.0
    %807 = vmatprep.subr.mxu0 0.0
    %808 = vmatpush1.msra.mxu0 0.0
    %809 = vmatprep.subr.mxu0 0.0
    %810 = vmatpush1.msra.mxu0 0.0
    %811 = vmatprep.subr.mxu0 0.0
    %812 = vmatpush1.msra.mxu0 0.0
    %813 = vmatprep.subr.mxu0 0.0
    %814 = vmatpush1.msra.mxu0 0.0
    %815 = vmatprep.subr.mxu0 0.0
    %816 = vmatpush1.msra.mxu0 0.0
    %817 = vmatprep.subr.mxu0 0.0
    %818 = vmatpush1.msra.mxu0 0.0
    %819 = vmatprep.subr.mxu0 0.0
    %820 = vmatpush1.msra.mxu0 0.0
    %821 = vmatprep.subr.mxu0 0.0
    %822 = vmatpush1.msra.mxu0 0.0
    %823 = vmatprep.subr.mxu0 0.0
    %824 = vmatpush1.msra.mxu0 0.0
    %825 = vmatprep.subr.mxu0 0.0
    %826 = vmatpush1.msra.mxu0 0.0
    %827 = vmatprep.subr.mxu0 0.0
    %828 = vmatpush1.msra.mxu0 0.0
    %829 = vmatprep.subr.mxu0 0.0
    %830 = vmatpush1.msra.mxu0 0.0
    %831 = vmatprep.subr.mxu0 0.0
    %832 = vmatpush1.msra.mxu0 0.0
    %833 = vmatprep.subr.mxu0 0.0
    %834 = vmatpush1.msra.mxu0 0.0
    %835 = vmatprep.subr.mxu0 0.0
    %836 = vmatpush1.msra.mxu0 0.0
    %837 = vmatprep.subr.mxu0 0.0
    %838 = vmatpush1.msra.mxu0 0.0
    %839 = vmatprep.subr.mxu0 0.0
    %840 = vmatpush1.msra.mxu0 0.0
    %841 = vmatprep.subr.mxu0 0.0
    %842 = vmatpush1.msra.mxu0 0.0
    %843 = vmatprep.subr.mxu0 0.0
    %844 = vmatpush1.msra.mxu0 0.0
    %845 = vmatprep.subr.mxu0 0.0
    %846 = vmatpush1.msra.mxu0 0.0
    %847 = vmatprep.subr.mxu0 0.0
    %848 = vmatpush1.msra.mxu0 0.0
    %849 = vmatprep.mubr.f32.mxu0 0.0
    %850 = vmatmul.mubr.f32.gmra.mrb[0].mxu0 %v783
    %v851 = vpop.f32.mrb[0].mxu0
    %v852 = vadd.f32 0.0, %v851
    %v853 = vpop.f32.mrb[0].mxu0
    %854 = vdwg.mxu0
    %v856 = vrot.slane %v852, 4
    %v858 = vadd.f32 %v124, %v856
    %v859 = vxor.u32 %v858, 2147483648
    %v860 = vmul.f32 %v859, 1.442695
    %v861 = vpow.pop %v860
    %v862 = vadd.f32 %v861, 1.0
    %v863 = vrcp.pop %v862
    %v864 = vmul.f32 1.0, %v863
    %v865 = vadd.f32 %v852, %v219
    %v867 = vrot.slane %v865, 4
    %868 = vrot.lane.b32.xlu0 %v867, 64
    %v869 = vpop.permute.xlu0 %868
    %v871 = vmul.f32 %v864, %v869
    %873 = vrot.lane.b32.xlu0 %v871, 64
    %v874 = vpop.permute.xlu0 %873
    %v876 = vadd.f32 %v124, %v874
    %v877 = vtanh.pop %v876
    %v878 = vsub.f32 1.0, %v864
    %880 = vrot.lane.b32.xlu0 %v877, 96
    %v881 = vpop.permute.xlu0 %880
    %v883 = vmul.f32 %v878, %v881
    %v884 = vrot.slane %v778, 6
    %v886 = vmul.f32 %v864, %v884
    %v887 = vadd.f32 %v883, %v886
    %v889 = vrot.slane %v887, 4
    %890 = vrot.lane.b32.xlu0 %v889, 96
    %v891 = vpop.permute.xlu0 %890
    %v892 = vsel %vm137, %v891, 0
    %894 = vmatprep.subr.mxu0 0.0
    %895 = vmatpush1.msra.mxu0 %v127
    %896 = vmatprep.subr.mxu0 0.0
    %897 = vmatpush1.msra.mxu0 %v128
    %898 = vmatprep.subr.mxu0 0.0
    %899 = vmatpush1.msra.mxu0 %v129
    %900 = vmatprep.subr.mxu0 0.0
    %901 = vmatpush1.msra.mxu0 %v130
    %902 = vmatprep.subr.mxu0 0.0
    %903 = vmatpush1.msra.mxu0 0.0
    %904 = vmatprep.subr.mxu0 0.0
    %905 = vmatpush1.msra.mxu0 0.0
    %906 = vmatprep.subr.mxu0 0.0
    %907 = vmatpush1.msra.mxu0 0.0
    %908 = vmatprep.subr.mxu0 0.0
    %909 = vmatpush1.msra.mxu0 0.0
    %910 = vmatprep.subr.mxu0 0.0
    %911 = vmatpush1.msra.mxu0 0.0
    %912 = vmatprep.subr.mxu0 0.0
    %913 = vmatpush1.msra.mxu0 0.0
    %914 = vmatprep.subr.mxu0 0.0
    %915 = vmatpush1.msra.mxu0 0.0
    %916 = vmatprep.subr.mxu0 0.0
    %917 = vmatpush1.msra.mxu0 0.0
    %918 = vmatprep.subr.mxu0 0.0
    %919 = vmatpush1.msra.mxu0 0.0
    %920 = vmatprep.subr.mxu0 0.0
    %921 = vmatpush1.msra.mxu0 0.0
    %922 = vmatprep.subr.mxu0 0.0
    %923 = vmatpush1.msra.mxu0 0.0
    %924 = vmatprep.subr.mxu0 0.0
    %925 = vmatpush1.msra.mxu0 0.0
    %926 = vmatprep.subr.mxu0 0.0
    %927 = vmatpush1.msra.mxu0 0.0
    %928 = vmatprep.subr.mxu0 0.0
    %929 = vmatpush1.msra.mxu0 0.0
    %930 = vmatprep.subr.mxu0 0.0
    %931 = vmatpush1.msra.mxu0 0.0
    %932 = vmatprep.subr.mxu0 0.0
    %933 = vmatpush1.msra.mxu0 0.0
    %934 = vmatprep.subr.mxu0 0.0
    %935 = vmatpush1.msra.mxu0 0.0
    %936 = vmatprep.subr.mxu0 0.0
    %937 = vmatpush1.msra.mxu0 0.0
    %938 = vmatprep.subr.mxu0 0.0
    %939 = vmatpush1.msra.mxu0 0.0
    %940 = vmatprep.subr.mxu0 0.0
    %941 = vmatpush1.msra.mxu0 0.0
    %942 = vmatprep.subr.mxu0 0.0
    %943 = vmatpush1.msra.mxu0 0.0
    %944 = vmatprep.subr.mxu0 0.0
    %945 = vmatpush1.msra.mxu0 0.0
    %946 = vmatprep.subr.mxu0 0.0
    %947 = vmatpush1.msra.mxu0 0.0
    %948 = vmatprep.subr.mxu0 0.0
    %949 = vmatpush1.msra.mxu0 0.0
    %950 = vmatprep.subr.mxu0 0.0
    %951 = vmatpush1.msra.mxu0 0.0
    %952 = vmatprep.subr.mxu0 0.0
    %953 = vmatpush1.msra.mxu0 0.0
    %954 = vmatprep.subr.mxu0 0.0
    %955 = vmatpush1.msra.mxu0 0.0
    %956 = vmatprep.subr.mxu0 0.0
    %957 = vmatpush1.msra.mxu0 0.0
    %958 = vmatprep.mubr.f32.mxu0 0.0
    %959 = vmatmul.mubr.f32.gmra.mrb[0].mxu0 %v892
    %v960 = vpop.f32.mrb[0].mxu0
    %v961 = vadd.f32 0.0, %v960
    %v962 = vpop.f32.mrb[0].mxu0
    %963 = vdwg.mxu0
    %v965 = vrot.slane %v961, 2
    %v967 = vadd.f32 %v124, %v965
    %v968 = vxor.u32 %v967, 2147483648
    %v969 = vmul.f32 %v968, 1.442695
    %v970 = vpow.pop %v969
    %v971 = vadd.f32 %v970, 1.0
    %v972 = vrcp.pop %v971
    %v973 = vmul.f32 1.0, %v972
    %v974 = vadd.f32 %v961, %v219
    %v976 = vrot.slane %v974, 2
    %977 = vrot.lane.b32.xlu0 %v976, 64
    %v978 = vpop.permute.xlu0 %977
    %v980 = vmul.f32 %v973, %v978
    %982 = vrot.lane.b32.xlu0 %v980, 64
    %v983 = vpop.permute.xlu0 %982
    %v985 = vadd.f32 %v124, %v983
    %v986 = vtanh.pop %v985
    %v987 = vsub.f32 1.0, %v973
    %989 = vrot.lane.b32.xlu0 %v986, 96
    %v990 = vpop.permute.xlu0 %989
    %v992 = vmul.f32 %v987, %v990
    %v993 = vrot.slane %v887, 6
    %v995 = vmul.f32 %v973, %v993
    %v996 = vadd.f32 %v992, %v995
    %999 = vrot.lane.b32.xlu0 %v459, 32
    %v1000 = vpop.permute.xlu0 %999
    %1002 = vrot.lane.b32.xlu0 %v568, 64
    %v1003 = vpop.permute.xlu0 %1002
    %1007 = vrot.lane.b32.xlu0 %v889, 32
    %v1008 = vpop.permute.xlu0 %1007
    %v1011 = vrot.slane %v996, 6
    %1012 = vrot.lane.b32.xlu0 %v1011, 64
    %v1013 = vpop.permute.xlu0 %1012
    %v1015 = vsel %vm137, %v243, %v350
    %vm1016 = vcmask 523264
    %v1017 = vsel %vm1016, %v1015, %v1000
    %vm1018 = vcmask 785408
    %v1019 = vsel %vm1018, %v1017, %v1003
    %v1020 = vsel %vm137, %v673, %v780
    %v1021 = vsel %vm1016, %v1020, %v1008
    %v1022 = vsel %vm1018, %v1021, %v1013
    %v1025 = vcombine.low %v1019, %v1022
    %v1027 = vunpack.c.l.s4 1983009808
    %v1028 = vunpack.c.0.s8 %v1027
    %v1029 = vlaneseq
    %v1030 = vshrl.u32 %v1029, 7
    %v1031 = vsub.s32 %v1028, %v1030
    %v1032 = vrot.slane %v1025, %v1031
    %1034 = vst [vmem:[%s5] sm:$0xf] %v1032
    // Predicated region
    $region26: #{video_embedding_forward.1} parent=1 // pred_check
      _
    $region27: #{video_embedding_forward.1} parent=1 // pred_check_branch
      %1036 = sbr.rel (0) target = $region29
    $region28: #{video_embedding_forward.1} parent=1 // pred_region
      _
    $region29: #{video_embedding_forward.1} parent=1 // pred_fallthru
      _
    // Predicated region
    $region30: #{video_embedding_forward.1} parent=1 // pred_check
      _
    $region31: #{video_embedding_forward.1} parent=1 // pred_check_branch
      %1038 = sbr.rel (0) target = $region33
    $region32: #{video_embedding_forward.1} parent=1 // pred_region
      _
    $region33: #{video_embedding_forward.1} parent=1 // pred_fallthru
      _
    %1039 = vsyncpa [#allocation3], 1

</llo_original>
